<compile_context>
chip_gen: v7x
topology: tpu7x:2x2x1
jax: 0.10.0
libtpu: 0.0.40
codegen_flags: <defaults>
</compile_context>

<pallas_src>
import functools

import jax
import jax.numpy as jnp
from jax.experimental import pallas as pl
from jax.experimental.pallas import tpu as pltpu

LN_EPS = 1e-5  # PyTorch nn.LayerNorm default


def _round_up(x, m):
    return (x + m - 1) // m * m


def mlp_kernel(x_ref, w_ref, b_ref, gamma_ref, beta_ref, o_ref, acc_ref, *, inv_h):
    """Produces one (tile_b, Hp) output tile. Grid = (batch tiles, K tiles)."""
    k = pl.program_id(1)

    @pl.when(k == 0)
    def _init():
        acc_ref[...] = jnp.zeros_like(acc_ref)

    # MXU matmul: bf16 (or f32) operands, f32 accumulation.
    acc_ref[...] += jnp.dot(
        x_ref[...], w_ref[...], preferred_element_type=jnp.float32
    )

    @pl.when(k == pl.num_programs(1) - 1)
    def _finalize():
        h = acc_ref[...] + b_ref[...]  # bias in f32

        # Fused LayerNorm statistics: single pass over h.
        # Padded hidden columns of h are exactly zero (zero weight cols / zero
        # bias), so they do not perturb the sums; divide by the REAL hidden
        # size via inv_h.
        s1 = jnp.sum(h, axis=-1, keepdims=True)
        s2 = jnp.sum(h * h, axis=-1, keepdims=True)
        mean = s1 * inv_h
        var = jnp.maximum(s2 * inv_h - mean * mean, 0.0)
        rstd = jax.lax.rsqrt(var + LN_EPS)            # EUP
        scale = gamma_ref[...] * rstd                 # gamma folded into scale
        shift = beta_ref[...] - mean * scale
        # Padded columns: scale == 0 and shift == 0 -> output 0 there.
        o_ref[...] = jnp.maximum(h * scale + shift, 0.0).astype(o_ref.dtype)


def mlp_forward(x, w, b, gamma, beta, *, tile_b=None, matmul_dtype=jnp.bfloat16):
    """x: (B, D_in); w: (D_in, H) (= Linear.weight^T); b/gamma/beta: (H,).

    Returns (B, H) float32. Matmul operands are cast to `matmul_dtype`
    (bf16 by default); LayerNorm / affine / ReLU math is float32.
    """
    B, D_in = x.shape
    H = w.shape[1]
    assert w.shape == (D_in, H)

    itemsize = jnp.dtype(matmul_dtype).itemsize

    # ---- padded, lane-dense geometry ------------------------------------
    Hp = _round_up(H, 128)                       # lane-dense output stores
    Kp = 128 if D_in < 128 else _round_up(D_in, 8)  # feed the MXU a full K block

    # K tiling: single K step while the weight slab is small; otherwise tile
    # K and accumulate in VMEM scratch (bounded working set -> v7x-safe).
    if Kp * Hp * itemsize <= (8 << 20):
        tile_k = Kp
    else:
        tile_k = 512
        Kp = _round_up(Kp, tile_k)

    # Batch tile: whole batch for small B (no grid overhead), capped at 512.
    if tile_b is None:
        tile_b = min(_round_up(B, 8), 512)
    else:
        tile_b = _round_up(tile_b, 8)
    Bp = _round_up(B, tile_b)

    # ---- wrapper-side padding (plumbing, not compute) --------------------
    x_p = jnp.pad(x, ((0, Bp - B), (0, Kp - D_in))).astype(matmul_dtype)
    w_p = jnp.pad(w, ((0, Kp - D_in), (0, Hp - H))).astype(matmul_dtype)
    b_p = jnp.pad(b, (0, Hp - H)).astype(jnp.float32).reshape(1, Hp)
    g_p = jnp.pad(gamma, (0, Hp - H)).astype(jnp.float32).reshape(1, Hp)
    be_p = jnp.pad(beta, (0, Hp - H)).astype(jnp.float32).reshape(1, Hp)

    grid = (Bp // tile_b, Kp // tile_k)

    # Scoped-VMEM budget (double-buffered inputs/outputs + f32 accumulator).
    vmem_need = (
        2 * tile_b * tile_k * itemsize      # x tiles
        + 2 * tile_k * Hp * itemsize        # weight tiles
        + 2 * 3 * Hp * 4                    # bias / gamma / beta
        + 2 * tile_b * Hp * 4               # output tiles
        + tile_b * Hp * 4                   # accumulator scratch
    )
    # NOTE: v7x has only 64 MiB physical VMEM; tile caps above keep this small.
    vmem_limit = int(min(max(2 * vmem_need, 32 << 20), 96 << 20))

    cost = pl.CostEstimate(
        flops=2 * Bp * Kp * Hp + 10 * Bp * Hp,
        transcendentals=Bp,
        bytes_accessed=(
            x_p.size * itemsize + w_p.size * itemsize + 3 * Hp * 4 + Bp * Hp * 4
        ),
    )

    kernel = functools.partial(mlp_kernel, inv_h=float(1.0 / H))

    out_p = pl.pallas_call(
        kernel,
        out_shape=jax.ShapeDtypeStruct((Bp, Hp), jnp.float32),
        grid_spec=pltpu.PrefetchScalarGridSpec(
            num_scalar_prefetch=0,
            grid=grid,
            in_specs=[
                pl.BlockSpec((tile_b, tile_k), lambda i, k: (i, k)),  # x
                pl.BlockSpec((tile_k, Hp), lambda i, k: (k, 0)),      # weight
                pl.BlockSpec((1, Hp), lambda i, k: (0, 0)),           # bias
                pl.BlockSpec((1, Hp), lambda i, k: (0, 0)),           # gamma
                pl.BlockSpec((1, Hp), lambda i, k: (0, 0)),           # beta
            ],
            out_specs=pl.BlockSpec((tile_b, Hp), lambda i, k: (i, 0)),
            scratch_shapes=[pltpu.VMEM((tile_b, Hp), jnp.float32)],
        ),
        compiler_params=pltpu.CompilerParams(
            dimension_semantics=("parallel", "arbitrary"),
            vmem_limit_bytes=vmem_limit,
        ),
        cost_estimate=cost,
    )(x_p, w_p, b_p, g_p, be_p)

    return out_p[:B, :H]


def reference_mlp(x, w, b, gamma, beta, matmul_dtype=jnp.float32):
    h = jnp.dot(
        x.astype(matmul_dtype), w.astype(matmul_dtype),
        preferred_element_type=jnp.float32,
    ) + b
    mean = jnp.mean(h, axis=-1, keepdims=True)
    var = jnp.mean((h - mean) ** 2, axis=-1, keepdims=True)
    y = (h - mean) * jax.lax.rsqrt(var + LN_EPS) * gamma + beta
    return jnp.maximum(y, 0.0)


if __name__ == "__main__":
    # Small shapes consistent with the module: batch=16, input_size=32, hidden=64.
    B, D_IN, HID = 16, 32, 64

    key = jax.random.PRNGKey(0)
    kx, kw, kb, kg, kbe = jax.random.split(key, 5)

    x = jax.random.normal(kx, (B, D_IN), dtype=jnp.float32)

    # Deterministic synthetic parameters (not a checkpoint load).
    bound = 1.0 / jnp.sqrt(jnp.float32(D_IN))
    w = jax.random.uniform(kw, (D_IN, HID), jnp.float32, -bound, bound)  # weight^T
    b = jax.random.uniform(kb, (HID,), jnp.float32, -bound, bound)       # bias
    gamma = jnp.ones((HID,), jnp.float32) + 0.1 * jax.random.normal(kg, (HID,), jnp.float32)
    beta = 0.1 * jax.random.normal(kbe, (HID,), jnp.float32)

    out = mlp_forward(x, w, b, gamma, beta)
    out = jax.block_until_ready(out)
    assert out.shape == (B, HID)

    # Check against a reference with matching matmul precision (tight tol).
    ref_bf16 = reference_mlp(x, w, b, gamma, beta, matmul_dtype=jnp.bfloat16)
    max_err = jnp.max(jnp.abs(out - ref_bf16))
    assert jnp.allclose(out, ref_bf16, atol=1e-3, rtol=1e-3), f"max abs err {max_err}"

    # Sanity check against exact f32 PyTorch semantics (looser: bf16 matmul).
    ref_f32 = reference_mlp(x, w, b, gamma, beta, matmul_dtype=jnp.float32)
    assert jnp.allclose(out, ref_f32, atol=5e-2, rtol=5e-2)

    print("KERNEL_OK")
</pallas_src>

<mosaic_0001>
module attributes {stable_mosaic.version = 11 : i64} {
  func.func @mlp_kernel(%arg0: i32, %arg1: i32, %arg2: memref<16x128xbf16, #tpu.memory_space<vmem>>, %arg3: memref<128x128xbf16, #tpu.memory_space<vmem>>, %arg4: memref<1x128xf32, #tpu.memory_space<vmem>>, %arg5: memref<1x128xf32, #tpu.memory_space<vmem>>, %arg6: memref<1x128xf32, #tpu.memory_space<vmem>>, %arg7: memref<16x128xf32, #tpu.memory_space<vmem>>, %arg8: memref<16x128xf32, #tpu.memory_space<vmem>>) attributes {dimension_semantics = [#tpu.dimension_semantics<parallel>, #tpu.dimension_semantics<arbitrary>], iteration_bounds = array<i64: 1, 1>, scalar_prefetch = 0 : i64, scratch_operands = 1 : i64, tpu.core_type = #tpu.core_type<tc>, window_params = [{transform_indices = @transform_0, window_bounds = array<i64: 16, 128>}, {transform_indices = @transform_1, window_bounds = array<i64: 128, 128>}, {pipeline_mode = #tpu.pipeline_mode<synchronous>, transform_indices = @transform_2, window_bounds = array<i64: 1, 128>}, {pipeline_mode = #tpu.pipeline_mode<synchronous>, transform_indices = @transform_3, window_bounds = array<i64: 1, 128>}, {pipeline_mode = #tpu.pipeline_mode<synchronous>, transform_indices = @transform_4, window_bounds = array<i64: 1, 128>}, {transform_indices = @transform_5, window_bounds = array<i64: 16, 128>}]} {
    %c0_i32 = arith.constant 0 : i32
    %0 = arith.cmpi eq, %arg1, %c0_i32 : i32
    %1 = arith.extui %0 : i1 to i32
    %c0_i32_0 = arith.constant 0 : i32
    %2 = arith.cmpi ne, %1, %c0_i32_0 : i32
    scf.if %2 {
      %cst_10 = arith.constant 0.000000e+00 : f32
      %12 = vector.broadcast %cst_10 : f32 to vector<16x128xf32>
      %c0_11 = arith.constant 0 : index
      %c0_12 = arith.constant 0 : index
      %13 = vector.load %arg8[%c0_11, %c0_12] : memref<16x128xf32, #tpu.memory_space<vmem>>, vector<16x128xf32>
      tpu.vector_store %arg8[%c0_11, %c0_12], %12 {strides = array<i32>} : memref<16x128xf32, #tpu.memory_space<vmem>>, vector<16x128xf32>,
    } else {
    }
    %c0 = arith.constant 0 : index
    %c0_1 = arith.constant 0 : index
    %3 = vector.load %arg8[%c0, %c0_1] : memref<16x128xf32, #tpu.memory_space<vmem>>, vector<16x128xf32>
    %c0_2 = arith.constant 0 : index
    %c0_3 = arith.constant 0 : index
    %4 = vector.load %arg2[%c0_2, %c0_3] : memref<16x128xbf16, #tpu.memory_space<vmem>>, vector<16x128xbf16>
    %c0_4 = arith.constant 0 : index
    %c0_5 = arith.constant 0 : index
    %5 = vector.load %arg3[%c0_4, %c0_5] : memref<128x128xbf16, #tpu.memory_space<vmem>>, vector<128x128xbf16>
    %cst = arith.constant dense<0.000000e+00> : vector<16x128xf32>
    %6 = tpu.matmul %4, %5, %cst {dimension_numbers = #tpu.dot_dimension_numbers<[1], [0], [0], [1], [0, 0, 1, 1], [], []>} : vector<16x128xbf16>, vector<128x128xbf16>, vector<16x128xf32> -> vector<16x128xf32>
    %7 = arith.addf %3, %6 : vector<16x128xf32>
    %c0_6 = arith.constant 0 : index
    %c0_7 = arith.constant 0 : index
    %8 = vector.load %arg8[%c0_6, %c0_7] : memref<16x128xf32, #tpu.memory_space<vmem>>, vector<16x128xf32>
    tpu.vector_store %arg8[%c0_6, %c0_7], %7 {strides = array<i32>} : memref<16x128xf32, #tpu.memory_space<vmem>>, vector<16x128xf32>,
    %c0_i32_8 = arith.constant 0 : i32
    %9 = arith.cmpi eq, %arg1, %c0_i32_8 : i32
    %10 = arith.extui %9 : i1 to i32
    %c0_i32_9 = arith.constant 0 : i32
    %11 = arith.cmpi ne, %10, %c0_i32_9 : i32
    scf.if %11 {
      %c0_10 = arith.constant 0 : index
      %c0_11 = arith.constant 0 : index
      %12 = vector.load %arg8[%c0_10, %c0_11] : memref<16x128xf32, #tpu.memory_space<vmem>>, vector<16x128xf32>
      %c0_12 = arith.constant 0 : index
      %c0_13 = arith.constant 0 : index
      %13 = vector.load %arg4[%c0_12, %c0_13] : memref<1x128xf32, #tpu.memory_space<vmem>>, vector<1x128xf32>
      %14 = vector.broadcast %13 : vector<1x128xf32> to vector<16x128xf32>
      %15 = arith.addf %12, %14 : vector<16x128xf32>
      %cst_14 = arith.constant dense<0.000000e+00> : vector<16xf32>
      %16 = vector.multi_reduction <add>, %15, %cst_14 [1] : vector<16x128xf32> to vector<16xf32>
      %17 = vector.shape_cast %16 : vector<16xf32> to vector<16x1xf32>
      %18 = arith.mulf %15, %15 : vector<16x128xf32>
      %cst_15 = arith.constant dense<0.000000e+00> : vector<16xf32>
      %19 = vector.multi_reduction <add>, %18, %cst_15 [1] : vector<16x128xf32> to vector<16xf32>
      %20 = vector.shape_cast %19 : vector<16xf32> to vector<16x1xf32>
      %cst_16 = arith.constant 1.562500e-02 : f32
      %21 = vector.broadcast %cst_16 : f32 to vector<16x1xf32>
      %22 = arith.mulf %17, %21 : vector<16x1xf32>
      %cst_17 = arith.constant 1.562500e-02 : f32
      %23 = vector.broadcast %cst_17 : f32 to vector<16x1xf32>
      %24 = arith.mulf %20, %23 : vector<16x1xf32>
      %25 = arith.mulf %22, %22 : vector<16x1xf32>
      %26 = arith.subf %24, %25 : vector<16x1xf32>
      %cst_18 = arith.constant 0.000000e+00 : f32
      %27 = vector.broadcast %cst_18 : f32 to vector<16x1xf32>
      %28 = arith.maximumf %26, %27 : vector<16x1xf32>
      %cst_19 = arith.constant 9.99999974E-6 : f32
      %29 = vector.broadcast %cst_19 : f32 to vector<16x1xf32>
      %30 = arith.addf %28, %29 : vector<16x1xf32>
      %31 = math.rsqrt %30 : vector<16x1xf32>
      %c0_20 = arith.constant 0 : index
      %c0_21 = arith.constant 0 : index
      %32 = vector.load %arg5[%c0_20, %c0_21] : memref<1x128xf32, #tpu.memory_space<vmem>>, vector<1x128xf32>
      %33 = vector.broadcast %32 : vector<1x128xf32> to vector<16x128xf32>
      %34 = vector.broadcast %31 : vector<16x1xf32> to vector<16x128xf32>
      %35 = arith.mulf %33, %34 : vector<16x128xf32>
      %c0_22 = arith.constant 0 : index
      %c0_23 = arith.constant 0 : index
      %36 = vector.load %arg6[%c0_22, %c0_23] : memref<1x128xf32, #tpu.memory_space<vmem>>, vector<1x128xf32>
      %37 = vector.broadcast %22 : vector<16x1xf32> to vector<16x128xf32>
      %38 = arith.mulf %37, %35 : vector<16x128xf32>
      %39 = vector.broadcast %36 : vector<1x128xf32> to vector<16x128xf32>
      %40 = arith.subf %39, %38 : vector<16x128xf32>
      %41 = arith.mulf %15, %35 : vector<16x128xf32>
      %42 = arith.addf %41, %40 : vector<16x128xf32>
      %cst_24 = arith.constant 0.000000e+00 : f32
      %43 = vector.broadcast %cst_24 : f32 to vector<16x128xf32>
      %44 = arith.maximumf %42, %43 : vector<16x128xf32>
      %c0_25 = arith.constant 0 : index
      %c0_26 = arith.constant 0 : index
      %45 = vector.load %arg7[%c0_25, %c0_26] : memref<16x128xf32, #tpu.memory_space<vmem>>, vector<16x128xf32>
      tpu.vector_store %arg7[%c0_25, %c0_26], %44 {strides = array<i32>} : memref<16x128xf32, #tpu.memory_space<vmem>>, vector<16x128xf32>,
    } else {
    }
    return
  }
  func.func @transform_0(%arg0: i32, %arg1: i32) -> (i32, i32) {
    %c0_i32 = arith.constant 0 : i32
    return %arg0, %arg1 : i32, i32
  }
  func.func @transform_1(%arg0: i32, %arg1: i32) -> (i32, i32) {
    %c0_i32 = arith.constant 0 : i32
    %c0_i32_0 = arith.constant 0 : i32
    return %arg1, %c0_i32 : i32, i32
  }
  func.func @transform_2(%arg0: i32, %arg1: i32) -> (i32, i32) {
    %c0_i32 = arith.constant 0 : i32
    %c0_i32_0 = arith.constant 0 : i32
    %c0_i32_1 = arith.constant 0 : i32
    return %c0_i32, %c0_i32_0 : i32, i32
  }
  func.func @transform_3(%arg0: i32, %arg1: i32) -> (i32, i32) {
    %c0_i32 = arith.constant 0 : i32
    %c0_i32_0 = arith.constant 0 : i32
    %c0_i32_1 = arith.constant 0 : i32
    return %c0_i32, %c0_i32_0 : i32, i32
  }
  func.func @transform_4(%arg0: i32, %arg1: i32) -> (i32, i32) {
    %c0_i32 = arith.constant 0 : i32
    %c0_i32_0 = arith.constant 0 : i32
    %c0_i32_1 = arith.constant 0 : i32
    return %c0_i32, %c0_i32_0 : i32, i32
  }
  func.func @transform_5(%arg0: i32, %arg1: i32) -> (i32, i32) {
    %c0_i32 = arith.constant 0 : i32
    %c0_i32_0 = arith.constant 0 : i32
    return %arg0, %c0_i32 : i32, i32
  }
}

</mosaic_0001>

<llo_original>
// kernel: tpu_custom_call.1
$region0: #{tpu_custom_call.1}
  #allocation0 [shape = 'u32[]', space=smem, size = 0x4, offset = 0x4, fixed_abs, tag = 'smem constant byte address 0x4 - core index']
  #allocation1 [shape = 'u32[144,128]{1,0:T(1,128)}', space=vmem, size = 0x12000, scoped, tag = 'internal scratch']
  #allocation2 [shape = 'f32[16,128]{1,0:T(8,128)}', space=vmem, size = 0x2000, scoped, tag = 'scratch operand']
  %s0 = inlined_call_operand.hbm [shape: bf16[16,128], index: 0, kind: input, shape index: {}]
  %s1 = inlined_call_operand.hbm [shape: bf16[128,128], index: 1, kind: input, shape index: {}]
  %s2 = inlined_call_operand.vmem [shape: f32[1,128], index: 2, kind: input, shape index: {}]
  %s3 = inlined_call_operand.vmem [shape: f32[1,128], index: 3, kind: input, shape index: {}]
  %s4 = inlined_call_operand.vmem [shape: f32[1,128], index: 4, kind: input, shape index: {}]
  %s5 = inlined_call_operand.hbm [shape: f32[16,128], index: 5, kind: output, shape index: {}]
  %s6 = sld [smem:[#allocation0]]
  $region46: #{tpu_custom_call.1} parent=0
    _
  %s8 = ssub.s32 1, %s6
  %s9 = scalar_select 0, %s8, %s6
  $region1: #{tpu_custom_call.1} parent=0
    #allocation3 [shape = 'u8[4096]{0}', space=vmem, size = 0x1000, scoped, tag = 'input window, operand 0, single buffered']
    #allocation4 [shape = 's32[1]{0}', space=sflag, size = 0x4, scoped, tag = 'scoped memory for tpu_custom_call.1']
    #allocation5 [shape = 's32[1]{0}', space=sflag, size = 0x4, scoped, tag = 'scoped memory for tpu_custom_call.1']
    #allocation6 [shape = 'u8[32768]{0}', space=vmem, size = 0x8000, scoped, tag = 'input window, operand 1, single buffered']
    #allocation7 [shape = 's32[1]{0}', space=sflag, size = 0x4, scoped, tag = 'scoped memory for tpu_custom_call.1']
    #allocation8 [shape = 'u8[8192]{0}', space=vmem, size = 0x2000, scoped, tag = 'output window, operand 0, single buffered']
    %10 = vsyncpa [#allocation4], 0
    %11 = vsyncpa [#allocation7], 0
    %12 = vsyncpa [#allocation5], 0
    // Predicated region
    $region2: #{tpu_custom_call.1} parent=1 // pred_check
      _
    $region3: #{tpu_custom_call.1} parent=1 // pred_check_branch
      %14 = sbr.rel (0) target = $region5
    $region4: #{tpu_custom_call.1} parent=1 // pred_region
      %s16 = ssub.s32 128, 128
      %17 = vsyncadd [#allocation4], %s16
      %s18 = sshll.u32 [#allocation3], 4
      %s19 = int_to_ptr.vmem [resolvable:$true] %s18
      %24 = dma.hbm_to_vmem [thread:$0]  %s0, 128, %s19, [#allocation4], 64, 64, 4
    $region5: #{tpu_custom_call.1} parent=1 // pred_fallthru
      _
    // Predicated region
    $region6: #{tpu_custom_call.1} parent=1 // pred_check
      _
    $region7: #{tpu_custom_call.1} parent=1 // pred_check_branch
      %26 = sbr.rel (0) target = $region9
    $region8: #{tpu_custom_call.1} parent=1 // pred_region
      %s28 = ssub.s32 1024, 1024
      %29 = vsyncadd [#allocation7], %s28
      %s30 = sshll.u32 [#allocation6], 4
      %s31 = int_to_ptr.vmem [resolvable:$true] %s30
      %36 = dma.hbm_to_vmem [thread:$0]  %s1, 1024, %s31, [#allocation7], 64, 64, 4
    $region9: #{tpu_custom_call.1} parent=1 // pred_fallthru
      _
    // Predicated region
    $region10: #{tpu_custom_call.1} parent=1 // pred_check
      _
    $region11: #{tpu_custom_call.1} parent=1 // pred_check_branch
      %38 = sbr.rel (0) target = $region13
    $region12: #{tpu_custom_call.1} parent=1 // pred_region
      _
    $region13: #{tpu_custom_call.1} parent=1 // pred_fallthru
      _
    // Predicated region
    $region14: #{tpu_custom_call.1} parent=1 // pred_check
      _
    $region15: #{tpu_custom_call.1} parent=1 // pred_check_branch
      %40 = sbr.rel (0) target = $region17
    $region16: #{tpu_custom_call.1} parent=1 // pred_region
      _
    $region17: #{tpu_custom_call.1} parent=1 // pred_fallthru
      _
    // Predicated region
    $region18: #{tpu_custom_call.1} parent=1 // pred_check
      _
    $region19: #{tpu_custom_call.1} parent=1 // pred_check_branch
      %42 = sbr.rel (0) target = $region21
    $region20: #{tpu_custom_call.1} parent=1 // pred_region
      _
    $region21: #{tpu_custom_call.1} parent=1 // pred_fallthru
      _
    // Predicated region
    $region22: #{tpu_custom_call.1} parent=1 // pred_check
      _
    $region23: #{tpu_custom_call.1} parent=1 // pred_check_branch
      %44 = sbr.rel (0) target = $region25
    $region24: #{tpu_custom_call.1} parent=1 // pred_region
      %45 = dma.done [#allocation4], 128
    $region25: #{tpu_custom_call.1} parent=1 // pred_fallthru
      _
    // Predicated region
    $region26: #{tpu_custom_call.1} parent=1 // pred_check
      _
    $region27: #{tpu_custom_call.1} parent=1 // pred_check_branch
      %47 = sbr.rel (0) target = $region29
    $region28: #{tpu_custom_call.1} parent=1 // pred_region
      %48 = dma.done [#allocation7], 1024
    $region29: #{tpu_custom_call.1} parent=1 // pred_fallthru
      _
    %p50 = scmp.eq.s32.totalorder 0, 0
    // Predicated region
    $region30: #{tpu_custom_call.1} parent=1 // pred_check
      %p51 = pneg %p50
    $region31: #{tpu_custom_call.1} parent=1 // pred_check_branch
      %53 = sbr.rel (%p51) target = $region33
    $region32: #{tpu_custom_call.1} parent=1 // pred_region
      %54 = vst [vmem:[#allocation2] sm:$0xff] 0.0
      %55 = vst [vmem:[#allocation2 + $0x8] sm:$0xff] 0.0
    $region33: #{tpu_custom_call.1} parent=1 // pred_fallthru
      _
    %v56 = vld [vmem:[#allocation2] sm:$0xff]
    %v57 = vld [vmem:[#allocation2 + $0x8] sm:$0xff]
    %v58 = vld [vmem:[#allocation3] sm:$0xf]
    %v59 = vld [vmem:[#allocation3 + $0x4] sm:$0xf]
    %v60 = vld [vmem:[#allocation6] sm:$0xf]
    %v61 = vld [vmem:[#allocation6 + $0x4] sm:$0xf]
    %v62 = vld [vmem:[#allocation6 + $0x8] sm:$0xf]
    %v63 = vld [vmem:[#allocation6 + $0xc] sm:$0xf]
    %v64 = vld [vmem:[#allocation6 + $0x10] sm:$0xf]
    %v65 = vld [vmem:[#allocation6 + $0x14] sm:$0xf]
    %v66 = vld [vmem:[#allocation6 + $0x18] sm:$0xf]
    %v67 = vld [vmem:[#allocation6 + $0x1c] sm:$0xf]
    %v68 = vld [vmem:[#allocation6 + $0x20] sm:$0xf]
    %v69 = vld [vmem:[#allocation6 + $0x24] sm:$0xf]
    %v70 = vld [vmem:[#allocation6 + $0x28] sm:$0xf]
    %v71 = vld [vmem:[#allocation6 + $0x2c] sm:$0xf]
    %v72 = vld [vmem:[#allocation6 + $0x30] sm:$0xf]
    %v73 = vld [vmem:[#allocation6 + $0x34] sm:$0xf]
    %v74 = vld [vmem:[#allocation6 + $0x38] sm:$0xf]
    %v75 = vld [vmem:[#allocation6 + $0x3c] sm:$0xf]
    %v78 = vunpack.c.l.b16 %v58
    %v79 = vunpack.c.l.b16 %v59
    %v80 = vpack.c.b16 %v79, %v78
    %v98 = vunpack.c.l.b16 %v60
    %v99 = vunpack.c.l.b16 %v61
    %v100 = vunpack.c.l.b16 %v62
    %v101 = vunpack.c.l.b16 %v63
    %v102 = vunpack.c.l.b16 %v64
    %v103 = vunpack.c.l.b16 %v65
    %v104 = vunpack.c.l.b16 %v66
    %v105 = vunpack.c.l.b16 %v67
    %v106 = vunpack.c.l.b16 %v68
    %v107 = vunpack.c.l.b16 %v69
    %v108 = vunpack.c.l.b16 %v70
    %v109 = vunpack.c.l.b16 %v71
    %v110 = vunpack.c.l.b16 %v72
    %v111 = vunpack.c.l.b16 %v73
    %v112 = vunpack.c.l.b16 %v74
    %v113 = vunpack.c.l.b16 %v75
    %v114 = vpack.c.b16 %v99, %v98
    %v115 = vpack.c.b16 %v101, %v100
    %v116 = vpack.c.b16 %v103, %v102
    %v117 = vpack.c.b16 %v105, %v104
    %v118 = vpack.c.b16 %v107, %v106
    %v119 = vpack.c.b16 %v109, %v108
    %v120 = vpack.c.b16 %v111, %v110
    %v121 = vpack.c.b16 %v113, %v112
    %130 = vmatprep.subr.bf16.mxu0 0
    %131 = vmatpush1.bf16.msra.mxu0 %v114
    %132 = vmatprep.subr.bf16.mxu0 0
    %133 = vmatpush1.bf16.msra.mxu0 %v115
    %134 = vmatprep.subr.bf16.mxu0 0
    %135 = vmatpush1.bf16.msra.mxu0 %v116
    %136 = vmatprep.subr.bf16.mxu0 0
    %137 = vmatpush1.bf16.msra.mxu0 %v117
    %138 = vmatprep.subr.bf16.mxu0 0
    %139 = vmatpush1.bf16.msra.mxu0 %v118
    %140 = vmatprep.subr.bf16.mxu0 0
    %141 = vmatpush1.bf16.msra.mxu0 %v119
    %142 = vmatprep.subr.bf16.mxu0 0
    %143 = vmatpush1.bf16.msra.mxu0 %v120
    %144 = vmatprep.subr.bf16.mxu0 0
    %145 = vmatpush1.bf16.msra.mxu0 %v121
    %146 = vmatprep.subr.bf16.mxu0 0
    %147 = vmatpush1.bf16.msra.mxu0 0
    %148 = vmatprep.subr.bf16.mxu0 0
    %149 = vmatpush1.bf16.msra.mxu0 0
    %150 = vmatprep.subr.bf16.mxu0 0
    %151 = vmatpush1.bf16.msra.mxu0 0
    %152 = vmatprep.subr.bf16.mxu0 0
    %153 = vmatpush1.bf16.msra.mxu0 0
    %154 = vmatprep.subr.bf16.mxu0 0
    %155 = vmatpush1.bf16.msra.mxu0 0
    %156 = vmatprep.subr.bf16.mxu0 0
    %157 = vmatpush1.bf16.msra.mxu0 0
    %158 = vmatprep.subr.bf16.mxu0 0
    %159 = vmatpush1.bf16.msra.mxu0 0
    %160 = vmatprep.subr.bf16.mxu0 0
    %161 = vmatpush1.bf16.msra.mxu0 0
    %162 = vmatprep.mubr.bf16.mxu0 0
    %163 = vmatmul.mubr.bf16.gmra.mrb[0].mxu0 %v80
    %v164 = vpop.f32.mrb[0].mxu0
    %v165 = vadd.f32 0.0, %v164
    %v166 = vpop.f32.mrb[0].mxu0
    %v167 = vpop.f32.mrb[0].mxu0
    %v168 = vadd.f32 0.0, %v167
    %v169 = vpop.f32.mrb[0].mxu0
    %170 = vdwg.mxu0
    %v171 = vadd.f32 %v56, %v165
    %v172 = vadd.f32 %v57, %v168
    %173 = vst [vmem:[#allocation2] sm:$0xff] %v171
    %174 = vst [vmem:[#allocation2 + $0x8] sm:$0xff] %v172
    // Predicated region
    $region34: #{tpu_custom_call.1} parent=1 // pred_check
      %p175 = pneg %p50
    $region35: #{tpu_custom_call.1} parent=1 // pred_check_branch
      %177 = sbr.rel (%p175) target = $region37
    $region36: #{tpu_custom_call.1} parent=1 // pred_region
      %v178 = vld [vmem:[#allocation2] sm:$0xff]
      %v179 = vld [vmem:[#allocation2 + $0x8] sm:$0xff]
      %v180 = vld [vmem:[%s2] sm:$0x1]
      %v182 = vlaneseq
      %v183 = vshrl.u32 %v182, 7
      %v184 = vsub.s32 0, %v183
      %v185 = vrot.slane %v180, %v184
      %v187 = vadd.f32 %v178, %v185
      %v188 = vadd.f32 %v179, %v185
      %189 = vadd.xlane.f32.xlu0 %v187
      %v190 = vpop.xlane.xlu0 %189
      %191 = vadd.xlane.f32.xlu0 %v188
      %v192 = vpop.xlane.xlu0 %191
      %v193 = vmul.f32 %v187, %v187
      %v194 = vmul.f32 %v188, %v188
      %195 = vadd.xlane.f32.xlu0 %v193
      %v196 = vpop.xlane.xlu0 %195
      %197 = vadd.xlane.f32.xlu0 %v194
      %v198 = vpop.xlane.xlu0 %197
      %v199 = vmul.f32 %v190, 0.015625
      %v200 = vmul.f32 %v192, 0.015625
      %v201 = vmul.f32 %v196, 0.015625
      %v202 = vmul.f32 %v198, 0.015625
      %v203 = vmul.f32 %v199, %v199
      %v204 = vmul.f32 %v200, %v200
      %v205 = vsub.f32 %v201, %v203
      %v206 = vsub.f32 %v202, %v204
      %v207 = vmax.f32 %v205, 0.0
      %v208 = vmax.f32 %v206, 0.0
      %v209 = vadd.f32 %v207, 1e-05
      %v210 = vadd.f32 %v208, 1e-05
      %v211 = vrsqrt.pop %v209
      %v212 = vrsqrt.pop %v210
      %v213 = vld [vmem:[%s3] sm:$0x1]
      %v215 = vlaneseq
      %v216 = vshrl.u32 %v215, 7
      %v217 = vsub.s32 0, %v216
      %v218 = vrot.slane %v213, %v217
      %v220 = vmul.f32 %v218, %v211
      %v221 = vmul.f32 %v218, %v212
      %v222 = vld [vmem:[%s4] sm:$0x1]
      %v223 = vmul.f32 %v199, %v220
      %v224 = vmul.f32 %v200, %v221
      %v226 = vlaneseq
      %v227 = vshrl.u32 %v226, 7
      %v228 = vsub.s32 0, %v227
      %v229 = vrot.slane %v222, %v228
      %v231 = vsub.f32 %v229, %v223
      %v232 = vsub.f32 %v229, %v224
      %v233 = vmul.f32 %v187, %v220
      %v234 = vmul.f32 %v188, %v221
      %v235 = vadd.f32 %v233, %v231
      %v236 = vadd.f32 %v234, %v232
      %v237 = vmax.f32 %v235, 0.0
      %v238 = vmax.f32 %v236, 0.0
      %239 = vst [vmem:[#allocation8] sm:$0xff] %v237
      %240 = vst [vmem:[#allocation8 + $0x8] sm:$0xff] %v238
    $region37: #{tpu_custom_call.1} parent=1 // pred_fallthru
      _
    // Predicated region
    $region38: #{tpu_custom_call.1} parent=1 // pred_check
      _
    $region39: #{tpu_custom_call.1} parent=1 // pred_check_branch
      %242 = sbr.rel (0) target = $region41
    $region40: #{tpu_custom_call.1} parent=1 // pred_region
      %s244 = ssub.s32 256, 256
      %245 = vsyncadd [#allocation5], %s244
      %s246 = sshll.u32 [#allocation8], 4
      %s247 = int_to_ptr.vmem [resolvable:$true] %s246
      %252 = dma.vmem_to_hbm [thread:$0]  %s247, 256, %s5, [#allocation5], 128, 128, 8
    $region41: #{tpu_custom_call.1} parent=1 // pred_fallthru
      _
    // Predicated region
    $region42: #{tpu_custom_call.1} parent=1 // pred_check
      _
    $region43: #{tpu_custom_call.1} parent=1 // pred_check_branch
      %254 = sbr.rel (0) target = $region45
    $region44: #{tpu_custom_call.1} parent=1 // pred_region
      %255 = dma.done [#allocation5], 256
    $region45: #{tpu_custom_call.1} parent=1 // pred_fallthru
      _
    %256 = vsyncpa [#allocation4], 1
    %257 = vsyncpa [#allocation7], 1
    %258 = vsyncpa [#allocation5], 1

</llo_original>
